<compile_context>
chip_gen: v7x
topology: tpu7x:2x2x1
jax: 0.10.0
libtpu: 0.0.40
codegen_flags: <defaults>
</compile_context>

<pallas_src>
import math
from functools import partial

import jax
import jax.numpy as jnp
from jax.experimental import pallas as pl
from jax.experimental.pallas import tpu as pltpu

_LANE = 128
_TARGET_BLOCK_BYTES = 2 << 20      # ~2 MiB HBM per block on the dense-slab path
_FALLBACK_BLOCK_BYTES = 1 << 20    # HBM bytes/block for the (1, N) masked-tail path
_VMEM_LIMIT = 48 << 20             # safe on v7x (64 MiB physical), ample on v5e/v6e


def _copy_kernel(x_ref, o_ref):
    # Lane+sublane-dense identity copy of one tile. The flatten itself was done
    # for free by the wrapper-side metadata reshape.
    o_ref[...] = x_ref[...]


def _sublane_pack(itemsize):
    # Rows per 32-bit sublane group: 8 (f32), 16 (bf16), 32 (int8/fp8).
    return max(8, 32 // itemsize)


def _slab_shape(total, itemsize):
    """(rows, lanes) dense 2D view of the flat buffer, or None if 128 does not divide."""
    if total % _LANE != 0:
        return None
    pack = _sublane_pack(itemsize)
    for lanes in (1024, 512, 256, 128):
        if total % lanes == 0 and total // lanes >= pack:
            return total // lanes, lanes
    return total // _LANE, _LANE            # tiny input: rows < pack, still legal


def _block_rows(rows, lanes, itemsize):
    """Row-block height: ~2 MiB blocks, multiple of the sublane pack, >=2 blocks if possible."""
    pack = _sublane_pack(itemsize)
    tr = _TARGET_BLOCK_BYTES // (lanes * itemsize)
    tr = max(pack, (tr // pack) * pack)
    if tr >= rows:
        if rows >= 2 * pack:
            # Split into >= 2 blocks so ("parallel",) can shard across both v7x
            # TensorCores and the in/out DMAs double-buffer.
            half = (rows + 1) // 2
            tr = ((half + pack - 1) // pack) * pack
            if tr < rows:
                return tr
        return rows
    return tr


def _identity_copy(slab, block_shape, index_map, grid, *, alias_output):
    itemsize = jnp.dtype(slab.dtype).itemsize
    extra = {"input_output_aliases": {0: 0}} if alias_output else {}
    return pl.pallas_call(
        _copy_kernel,
        out_shape=jax.ShapeDtypeStruct(slab.shape, slab.dtype),
        grid_spec=pltpu.PrefetchScalarGridSpec(
            num_scalar_prefetch=0,
            grid=grid,
            in_specs=[pl.BlockSpec(block_shape, index_map)],
            out_specs=pl.BlockSpec(block_shape, index_map),
        ),
        compiler_params=pltpu.CompilerParams(
            dimension_semantics=("parallel",),
            vmem_limit_bytes=_VMEM_LIMIT,
        ),
        cost_estimate=pl.CostEstimate(
            flops=0,
            transcendentals=0,
            bytes_accessed=2 * slab.size * itemsize,
        ),
        **extra,
    )(slab)


@partial(jax.jit, static_argnames=("use_pallas", "alias_output"))
def flatten(x, *, use_pallas=True, alias_output=False):
    """Pallas equivalent of torch Flatten: (B, ...) -> (B, prod(rest))."""
    b = x.shape[0]
    flat = math.prod(x.shape[1:])
    out = x.reshape(b, flat)            # == torch .view(B, -1): free metadata reshape

    if not use_pallas or out.size == 0:
        # Recommended production path: flatten is pure metadata, 0 bytes moved.
        return out

    total = b * flat
    itemsize = jnp.dtype(x.dtype).itemsize
    slab_dims = _slab_shape(total, itemsize)

    if slab_dims is not None:
        rows, lanes = slab_dims
        slab = out.reshape(rows, lanes)                 # still a metadata reshape
        tr = _block_rows(rows, lanes, itemsize)
        y = _identity_copy(
            slab, (tr, lanes), lambda i: (i, 0), (pl.cdiv(rows, tr),),
            alias_output=alias_output)
    else:
        # total not a multiple of 128: lane-tile a (1, total) view with a cdiv
        # grid; Pallas masks the partial last block.  Block width sized so the
        # 8-sublane-padded VMEM footprint stays small on v7x.
        slab = out.reshape(1, total)
        if total <= _LANE:
            tf, grid = total, (1,)
        else:
            tf = min(((_FALLBACK_BLOCK_BYTES // itemsize) // _LANE) * _LANE,
                     pl.cdiv(total, _LANE) * _LANE)
            grid = (pl.cdiv(total, tf),)
        y = _identity_copy(
            slab, (1, tf), lambda j: (0, j), grid, alias_output=alias_output)

    return y.reshape(b, flat)
    # TODO(synk): callers that donate x should pass alias_output=True (and
    # jax.jit(..., donate_argnums=0)) to elide the output HBM allocation.


if __name__ == "__main__":
    key = jax.random.PRNGKey(0)

    # Shape consistent with a conv feature map: batch=2, channels=4, 16x16.
    x = jax.random.normal(key, (2, 4, 16, 16), dtype=jnp.float32)
    y = flatten(x)
    jax.block_until_ready(y)

    y_ref = x.reshape(x.shape[0], -1)   # torch .view(B, -1) row-major semantics
    assert y.shape == (2, 4 * 16 * 16), y.shape
    assert jnp.array_equal(y, y_ref), "mismatch vs reference reshape"

    # Exercise the non-128-multiple (masked tail) path too.
    x_odd = jax.random.normal(key, (3, 5, 7), dtype=jnp.float32)
    y_odd = flatten(x_odd)
    jax.block_until_ready(y_odd)
    assert jnp.array_equal(y_odd, x_odd.reshape(3, -1)), "odd-shape mismatch"

    print("KERNEL_OK")
</pallas_src>

<mosaic_0001>
module attributes {stable_mosaic.version = 11 : i64} {
  func.func @_copy_kernel(%arg0: i32, %arg1: memref<8x256xf32, #tpu.memory_space<vmem>>, %arg2: memref<8x256xf32, #tpu.memory_space<vmem>>) attributes {dimension_semantics = [#tpu.dimension_semantics<parallel>], iteration_bounds = array<i64: 1>, scalar_prefetch = 0 : i64, scratch_operands = 0 : i64, tpu.core_type = #tpu.core_type<tc>, window_params = [{transform_indices = @transform_0, window_bounds = array<i64: 8, 256>}, {transform_indices = @transform_1, window_bounds = array<i64: 8, 256>}]} {
    %c0 = arith.constant 0 : index
    %c0_0 = arith.constant 0 : index
    %0 = vector.load %arg1[%c0, %c0_0] : memref<8x256xf32, #tpu.memory_space<vmem>>, vector<8x256xf32>
    %c0_1 = arith.constant 0 : index
    %c0_2 = arith.constant 0 : index
    %1 = vector.load %arg2[%c0_1, %c0_2] : memref<8x256xf32, #tpu.memory_space<vmem>>, vector<8x256xf32>
    tpu.vector_store %arg2[%c0_1, %c0_2], %0 {strides = array<i32>} : memref<8x256xf32, #tpu.memory_space<vmem>>, vector<8x256xf32>,
    return
  }
  func.func @transform_0(%arg0: i32) -> (i32, i32) {
    %c0_i32 = arith.constant 0 : i32
    %c0_i32_0 = arith.constant 0 : i32
    return %arg0, %c0_i32 : i32, i32
  }
  func.func @transform_1(%arg0: i32) -> (i32, i32) {
    %c0_i32 = arith.constant 0 : i32
    %c0_i32_0 = arith.constant 0 : i32
    return %arg0, %c0_i32 : i32, i32
  }
}

</mosaic_0001>

<llo_original>
// kernel: flatten.1
$region0: #{flatten.1}
  #allocation0 [shape = 'u32[]', space=smem, size = 0x4, offset = 0x4, fixed_abs, tag = 'smem constant byte address 0x4 - core index']
  #allocation1 [shape = 'u32[144,128]{1,0:T(1,128)}', space=vmem, size = 0x12000, scoped, tag = 'internal scratch']
  %s0 = inlined_call_operand.vmem [shape: f32[8,256], index: 0, kind: input, shape index: {}]
  %s1 = inlined_call_operand.vmem [shape: f32[8,256], index: 1, kind: output, shape index: {}]
  %s2 = sld [smem:[#allocation0]]
  $region14: #{flatten.1} parent=0
    _
  %s4 = ssub.s32 1, %s2
  %s5 = scalar_select 0, %s4, %s2
  // Predicated region
  $region2: #{flatten.1} parent=0 // pred_check
    _
  $region3: #{flatten.1} parent=0 // pred_check_branch
    %7 = sbr.rel (0) target = $region5
  $region4: #{flatten.1} parent=0 // pred_region
    _
  $region5: #{flatten.1} parent=0 // pred_fallthru
    _
  %v8 = vld [vmem:[%s0] sm:$0xff]
  %v9 = vld [vmem:[%s0 + $0x8] sm:$0xff]
  %10 = vst [vmem:[%s1] sm:$0xff] %v8
  %11 = vst [vmem:[%s1 + $0x8] sm:$0xff] %v9
  // Predicated region
  $region6: #{flatten.1} parent=0 // pred_check
    _
  $region7: #{flatten.1} parent=0 // pred_check_branch
    %13 = sbr.rel (0) target = $region9
  $region8: #{flatten.1} parent=0 // pred_region
    _
  $region9: #{flatten.1} parent=0 // pred_fallthru
    _
  // Predicated region
  $region10: #{flatten.1} parent=0 // pred_check
    _
  $region11: #{flatten.1} parent=0 // pred_check_branch
    %15 = sbr.rel (0) target = $region13
  $region12: #{flatten.1} parent=0 // pred_region
    _
  $region13: #{flatten.1} parent=0 // pred_fallthru
    _

</llo_original>
